<compile_context>
chip_gen: v7x
topology: tpu7x:2x2x1
jax: 0.10.0
libtpu: 0.0.40
codegen_flags: <defaults>
</compile_context>

<pallas_src>
import functools

import jax
import jax.numpy as jnp
from jax import lax
from jax.experimental import pallas as pl
from jax.experimental.pallas import tpu as pltpu


def _round_up(a, m):
    return ((a + m - 1) // m) * m


def _tuplet_loss_kernel(x_ref, o_ref, acc_ref, *, total_batch, tuplets,
                        rows_per_block, chunk_rows, num_blocks,
                        blocks_per_split):
    # x_ref  : (T, rows_per_block, 128) block of [T, R_pad, 128]
    # o_ref  : (1, 1, 1) per-split partial sum
    # acc_ref: (chunk_rows, 128) f32 dense accumulator scratch
    c = pl.program_id(0)                       # split (TensorCore) index
    i = pl.program_id(1)                       # block index within the split
    gb = c * blocks_per_split + i              # global (unclamped) block index

    @pl.when(i == 0)
    def _():
        acc_ref[...] = jnp.zeros_like(acc_ref)

    n_chunks = rows_per_block // chunk_rows
    row_refs = [x_ref.at[k] for k in range(tuplets)]   # zero-cost views

    def accumulate(masked):
        if masked:
            rows = lax.broadcasted_iota(jnp.int32, (chunk_rows, 128), 0)
            lanes = lax.broadcasted_iota(jnp.int32, (chunk_rows, 128), 1)
            pos = rows * 128 + lanes           # within-chunk linear offset

        def body(j, carry):
            base = pl.multiple_of(j * chunk_rows, chunk_rows)
            sl = pl.ds(base, chunk_rows)
            a = row_refs[0][sl, :].astype(jnp.float32)          # anchor
            d_pos = jnp.abs(a - row_refs[1][sl, :].astype(jnp.float32))
            s = jnp.zeros((chunk_rows, 128), jnp.float32)
            for k in range(2, tuplets):        # static, tiny unroll over T
                d_k = jnp.abs(a - row_refs[k][sl, :].astype(jnp.float32))
                s = s + jnp.exp(d_pos - d_k)
            loss = jnp.log(s + 1.0)            # matches reference (no LSE stab.)
            if masked:
                start = (gb * rows_per_block + base) * 128
                loss = jnp.where(pos + start < total_batch, loss, 0.0)
            acc_ref[...] += loss               # pure VPU accumulate
            return carry

        lax.fori_loop(0, n_chunks, body, 0,
                      unroll=True if n_chunks <= 16 else 8)

    # Only the last global block (and the clamped overflow block of the second
    # split when num_blocks is odd) can contain padded / out-of-range lanes.
    @pl.when(gb < num_blocks - 1)
    def _():
        accumulate(masked=False)

    @pl.when(gb >= num_blocks - 1)
    def _():
        accumulate(masked=True)

    @pl.when(i == pl.num_programs(1) - 1)
    def _():
        # Single cross-lane reduce per split, once per kernel.
        o_ref[...] = jnp.sum(acc_ref[...], keepdims=True).reshape(1, 1, 1)


def tuplet_loss(output, batch_data=None, *, block_rows=512):
    """output: [B, T, 1] float array. Returns scalar f32 loss (mean over B)."""
    del batch_data  # unused by the reference forward
    B, T, C = output.shape
    assert C == 1, "reference module squeezes dim=2, so it must be size 1"
    assert T >= 2, "need at least anchor + positive"
    assert block_rows % 32 == 0

    R = pl.cdiv(B, 128)                 # batch rows of 128 lanes
    R_pad = _round_up(R, 16)            # pad to the (16,128) layout granule only
    B_pad = R_pad * 128

    # One-time relayout: [B, T, 1] -> [T, R_pad, 128] (batch on sublanes/lanes).
    # TODO(synk): have the producer emit the [T, B] layout directly so this
    # transpose (an extra HBM round trip) disappears for very large batches.
    xt = jnp.squeeze(output, axis=2).T                        # [T, B]
    if B_pad != B:
        xt = jnp.pad(xt, ((0, 0), (0, B_pad - B)))            # masked in kernel
    x3 = xt.reshape(T, R_pad, 128)

    rows_bb = R_pad if R_pad <= block_rows else block_rows    # mult of 8, <= R_pad
    chunk = 32 if rows_bb % 32 == 0 else (16 if rows_bb % 16 == 0 else 8)
    nb = pl.cdiv(R_pad, rows_bb)                              # total blocks

    n_split = 2 if nb >= 2 else 1       # 2-way batch split -> both TCs on v7x
    bpc = pl.cdiv(nb, n_split)          # blocks per split (overflow is clamped)

    kernel = functools.partial(
        _tuplet_loss_kernel, total_batch=B, tuplets=T, rows_per_block=rows_bb,
        chunk_rows=chunk, num_blocks=nb, blocks_per_split=bpc)

    def in_map(c, i):
        # Clamp so the overflow iteration of the second split re-reads the last
        # block (its contribution is fully masked out inside the kernel).
        return (0, jnp.minimum(c * bpc + i, nb - 1), 0)

    out = pl.pallas_call(
        kernel,
        out_shape=jax.ShapeDtypeStruct((n_split, 1, 1), jnp.float32),
        grid_spec=pltpu.PrefetchScalarGridSpec(
            num_scalar_prefetch=0,
            grid=(n_split, bpc),
            in_specs=[pl.BlockSpec((T, rows_bb, 128), in_map)],
            out_specs=pl.BlockSpec((1, 1, 1), lambda c, i: (c, 0, 0)),
            scratch_shapes=[pltpu.VMEM((chunk, 128), jnp.float32)],
        ),
        compiler_params=pltpu.CompilerParams(
            dimension_semantics=("parallel", "arbitrary")),
    )(x3)

    return jnp.sum(out) / B


def _reference(output):
    # pure-JAX mirror of the PyTorch forward, for verification
    v = output[:, 0, :]
    v3 = v[:, None, :] - output
    v4 = jnp.abs(v3)[:, :, 0]
    v5 = v4[:, 1:]
    v8 = v5[:, 0:1] - v5
    v9 = v8[:, 1:]
    v13 = jnp.log(jnp.sum(jnp.exp(v9), axis=1) + 1.0)
    return jnp.mean(v13, axis=0)


if __name__ == "__main__":
    key = jax.random.PRNGKey(0)
    B, T = 16, 6                                      # 1 anchor, 1 positive, 4 negatives
    output = jax.random.normal(key, (B, T, 1), dtype=jnp.float32)
    batch_data = jnp.zeros((B,), dtype=jnp.float32)   # unused, mirrors torch signature

    loss = tuplet_loss(output, batch_data)
    jax.block_until_ready(loss)
    ref = _reference(output)
    assert jnp.allclose(loss, ref, atol=1e-5, rtol=1e-5), (loss, ref)

    # batch size that is not a lane multiple (padding / mask path)
    B2 = 300
    out2 = jax.random.normal(jax.random.PRNGKey(1), (B2, T, 1), jnp.float32)
    loss2 = tuplet_loss(out2)
    jax.block_until_ready(loss2)
    assert jnp.allclose(loss2, _reference(out2), atol=1e-5, rtol=1e-5), (
        loss2, _reference(out2))

    # multi-block grid + two-way core split + ragged last block + clamped
    # overflow block (small block_rows just to exercise the paths cheaply)
    B3 = 9000
    out3 = jax.random.normal(jax.random.PRNGKey(2), (B3, T, 1), jnp.float32)
    loss3 = tuplet_loss(out3, block_rows=32)
    jax.block_until_ready(loss3)
    assert jnp.allclose(loss3, _reference(out3), atol=1e-5, rtol=1e-4), (
        loss3, _reference(out3))

    print("KERNEL_OK")
</pallas_src>

<mosaic_0001>
module attributes {stable_mosaic.version = 11 : i64} {
  func.func @_tuplet_loss_kernel(%arg0: i32, %arg1: i32, %arg2: memref<6x16x128xf32, #tpu.memory_space<vmem>>, %arg3: memref<1x1x1xf32, #tpu.memory_space<vmem>>, %arg4: memref<16x128xf32, #tpu.memory_space<vmem>>) attributes {dimension_semantics = [#tpu.dimension_semantics<parallel>, #tpu.dimension_semantics<arbitrary>], iteration_bounds = array<i64: 1, 1>, scalar_prefetch = 0 : i64, scratch_operands = 1 : i64, tpu.core_type = #tpu.core_type<tc>, window_params = [{transform_indices = @transform_0, window_bounds = array<i64: 6, 16, 128>}, {transform_indices = @transform_1, window_bounds = array<i64: 1, 1, 1>}]} {
    %c1_i32 = arith.constant 1 : i32
    %0 = arith.muli %arg0, %c1_i32 : i32
    %1 = arith.addi %0, %arg1 : i32
    %c0_i32 = arith.constant 0 : i32
    %2 = arith.cmpi eq, %arg1, %c0_i32 : i32
    %3 = arith.extui %2 : i1 to i32
    %c0_i32_0 = arith.constant 0 : i32
    %4 = arith.cmpi ne, %3, %c0_i32_0 : i32
    scf.if %4 {
      %cst = arith.constant 0.000000e+00 : f32
      %14 = vector.broadcast %cst : f32 to vector<16x128xf32>
      %c0 = arith.constant 0 : index
      %c0_15 = arith.constant 0 : index
      %15 = vector.load %arg4[%c0, %c0_15] : memref<16x128xf32, #tpu.memory_space<vmem>>, vector<16x128xf32>
      tpu.vector_store %arg4[%c0, %c0_15], %14 {strides = array<i32>} : memref<16x128xf32, #tpu.memory_space<vmem>>, vector<16x128xf32>,
    } else {
    }
    %c0_i32_1 = arith.constant 0 : i32
    %5 = arith.cmpi slt, %1, %c0_i32_1 : i32
    %6 = arith.extui %5 : i1 to i32
    %c0_i32_2 = arith.constant 0 : i32
    %c1_i32_3 = arith.constant 1 : i32
    %c2_i32 = arith.constant 2 : i32
    %c3_i32 = arith.constant 3 : i32
    %c4_i32 = arith.constant 4 : i32
    %c5_i32 = arith.constant 5 : i32
    %c0_i32_4 = arith.constant 0 : i32
    %7 = arith.cmpi ne, %6, %c0_i32_4 : i32
    scf.if %7 {
      %c0_i32_15 = arith.constant 0 : i32
      %c16_i32 = arith.constant 16 : i32
      %14 = arith.muli %c0_i32_15, %c16_i32 : i32
      %15 = tpu.assume_multiple %14, 16 : i32
      %c0_i32_16 = arith.constant 0 : i32
      %c0_i32_17 = arith.constant 0 : i32
      %16 = tpu.memref_slice %arg2[%c0_i32_2, %c0_i32_16, %c0_i32_17] : memref<6x16x128xf32, #tpu.memory_space<vmem>> -> memref<1x16x128xf32, #tpu.memory_space<vmem>>
      %17 = tpu.memref_squeeze %16 : memref<1x16x128xf32, #tpu.memory_space<vmem>> -> memref<16x128xf32, #tpu.memory_space<vmem>>
      %18 = arith.index_cast %15 : i32 to index
      %c0 = arith.constant 0 : index
      %19 = vector.load %17[%18, %c0] : memref<16x128xf32, #tpu.memory_space<vmem>>, vector<16x128xf32>
      %c0_i32_18 = arith.constant 0 : i32
      %c0_i32_19 = arith.constant 0 : i32
      %20 = tpu.memref_slice %arg2[%c1_i32_3, %c0_i32_18, %c0_i32_19] : memref<6x16x128xf32, #tpu.memory_space<vmem>> -> memref<1x16x128xf32, #tpu.memory_space<vmem>>
      %21 = tpu.memref_squeeze %20 : memref<1x16x128xf32, #tpu.memory_space<vmem>> -> memref<16x128xf32, #tpu.memory_space<vmem>>
      %22 = arith.index_cast %15 : i32 to index
      %c0_20 = arith.constant 0 : index
      %23 = vector.load %21[%22, %c0_20] : memref<16x128xf32, #tpu.memory_space<vmem>>, vector<16x128xf32>
      %24 = arith.subf %19, %23 : vector<16x128xf32>
      %25 = math.absf %24 : vector<16x128xf32>
      %cst = arith.constant 0.000000e+00 : f32
      %26 = vector.broadcast %cst : f32 to vector<16x128xf32>
      %c0_i32_21 = arith.constant 0 : i32
      %c0_i32_22 = arith.constant 0 : i32
      %27 = tpu.memref_slice %arg2[%c2_i32, %c0_i32_21, %c0_i32_22] : memref<6x16x128xf32, #tpu.memory_space<vmem>> -> memref<1x16x128xf32, #tpu.memory_space<vmem>>
      %28 = tpu.memref_squeeze %27 : memref<1x16x128xf32, #tpu.memory_space<vmem>> -> memref<16x128xf32, #tpu.memory_space<vmem>>
      %29 = arith.index_cast %15 : i32 to index
      %c0_23 = arith.constant 0 : index
      %30 = vector.load %28[%29, %c0_23] : memref<16x128xf32, #tpu.memory_space<vmem>>, vector<16x128xf32>
      %31 = arith.subf %19, %30 : vector<16x128xf32>
      %32 = math.absf %31 : vector<16x128xf32>
      %33 = arith.subf %25, %32 : vector<16x128xf32>
      %34 = math.exp %33 : vector<16x128xf32>
      %35 = arith.addf %26, %34 : vector<16x128xf32>
      %c0_i32_24 = arith.constant 0 : i32
      %c0_i32_25 = arith.constant 0 : i32
      %36 = tpu.memref_slice %arg2[%c3_i32, %c0_i32_24, %c0_i32_25] : memref<6x16x128xf32, #tpu.memory_space<vmem>> -> memref<1x16x128xf32, #tpu.memory_space<vmem>>
      %37 = tpu.memref_squeeze %36 : memref<1x16x128xf32, #tpu.memory_space<vmem>> -> memref<16x128xf32, #tpu.memory_space<vmem>>
      %38 = arith.index_cast %15 : i32 to index
      %c0_26 = arith.constant 0 : index
      %39 = vector.load %37[%38, %c0_26] : memref<16x128xf32, #tpu.memory_space<vmem>>, vector<16x128xf32>
      %40 = arith.subf %19, %39 : vector<16x128xf32>
      %41 = math.absf %40 : vector<16x128xf32>
      %42 = arith.subf %25, %41 : vector<16x128xf32>
      %43 = math.exp %42 : vector<16x128xf32>
      %44 = arith.addf %35, %43 : vector<16x128xf32>
      %c0_i32_27 = arith.constant 0 : i32
      %c0_i32_28 = arith.constant 0 : i32
      %45 = tpu.memref_slice %arg2[%c4_i32, %c0_i32_27, %c0_i32_28] : memref<6x16x128xf32, #tpu.memory_space<vmem>> -> memref<1x16x128xf32, #tpu.memory_space<vmem>>
      %46 = tpu.memref_squeeze %45 : memref<1x16x128xf32, #tpu.memory_space<vmem>> -> memref<16x128xf32, #tpu.memory_space<vmem>>
      %47 = arith.index_cast %15 : i32 to index
      %c0_29 = arith.constant 0 : index
      %48 = vector.load %46[%47, %c0_29] : memref<16x128xf32, #tpu.memory_space<vmem>>, vector<16x128xf32>
      %49 = arith.subf %19, %48 : vector<16x128xf32>
      %50 = math.absf %49 : vector<16x128xf32>
      %51 = arith.subf %25, %50 : vector<16x128xf32>
      %52 = math.exp %51 : vector<16x128xf32>
      %53 = arith.addf %44, %52 : vector<16x128xf32>
      %c0_i32_30 = arith.constant 0 : i32
      %c0_i32_31 = arith.constant 0 : i32
      %54 = tpu.memref_slice %arg2[%c5_i32, %c0_i32_30, %c0_i32_31] : memref<6x16x128xf32, #tpu.memory_space<vmem>> -> memref<1x16x128xf32, #tpu.memory_space<vmem>>
      %55 = tpu.memref_squeeze %54 : memref<1x16x128xf32, #tpu.memory_space<vmem>> -> memref<16x128xf32, #tpu.memory_space<vmem>>
      %56 = arith.index_cast %15 : i32 to index
      %c0_32 = arith.constant 0 : index
      %57 = vector.load %55[%56, %c0_32] : memref<16x128xf32, #tpu.memory_space<vmem>>, vector<16x128xf32>
      %58 = arith.subf %19, %57 : vector<16x128xf32>
      %59 = math.absf %58 : vector<16x128xf32>
      %60 = arith.subf %25, %59 : vector<16x128xf32>
      %61 = math.exp %60 : vector<16x128xf32>
      %62 = arith.addf %53, %61 : vector<16x128xf32>
      %cst_33 = arith.constant 1.000000e+00 : f32
      %63 = vector.broadcast %cst_33 : f32 to vector<16x128xf32>
      %64 = arith.addf %62, %63 : vector<16x128xf32>
      %65 = math.log %64 : vector<16x128xf32>
      %c0_34 = arith.constant 0 : index
      %c0_35 = arith.constant 0 : index
      %66 = vector.load %arg4[%c0_34, %c0_35] : memref<16x128xf32, #tpu.memory_space<vmem>>, vector<16x128xf32>
      %67 = arith.addf %66, %65 : vector<16x128xf32>
      %c0_36 = arith.constant 0 : index
      %c0_37 = arith.constant 0 : index
      %68 = vector.load %arg4[%c0_36, %c0_37] : memref<16x128xf32, #tpu.memory_space<vmem>>, vector<16x128xf32>
      tpu.vector_store %arg4[%c0_36, %c0_37], %67 {strides = array<i32>} : memref<16x128xf32, #tpu.memory_space<vmem>>, vector<16x128xf32>,
      %c1_i32_38 = arith.constant 1 : i32
    } else {
    }
    %c0_i32_5 = arith.constant 0 : i32
    %8 = arith.cmpi sge, %1, %c0_i32_5 : i32
    %9 = arith.extui %8 : i1 to i32
    %c0_i32_6 = arith.constant 0 : i32
    %c1_i32_7 = arith.constant 1 : i32
    %c2_i32_8 = arith.constant 2 : i32
    %c3_i32_9 = arith.constant 3 : i32
    %c4_i32_10 = arith.constant 4 : i32
    %c5_i32_11 = arith.constant 5 : i32
    %c0_i32_12 = arith.constant 0 : i32
    %10 = arith.cmpi ne, %9, %c0_i32_12 : i32
    scf.if %10 {
      %14 = tpu.iota {dimensions = array<i32: 0>} : vector<16x128xi32>
      %15 = tpu.iota {dimensions = array<i32: 1>} : vector<16x128xi32>
      %c128_i32 = arith.constant 128 : i32
      %16 = vector.broadcast %c128_i32 : i32 to vector<16x128xi32>
      %17 = arith.muli %14, %16 : vector<16x128xi32>
      %18 = arith.addi %17, %15 : vector<16x128xi32>
      %c0_i32_15 = arith.constant 0 : i32
      %c16_i32 = arith.constant 16 : i32
      %19 = arith.muli %c0_i32_15, %c16_i32 : i32
      %20 = tpu.assume_multiple %19, 16 : i32
      %c0_i32_16 = arith.constant 0 : i32
      %c0_i32_17 = arith.constant 0 : i32
      %21 = tpu.memref_slice %arg2[%c0_i32_6, %c0_i32_16, %c0_i32_17] : memref<6x16x128xf32, #tpu.memory_space<vmem>> -> memref<1x16x128xf32, #tpu.memory_space<vmem>>
      %22 = tpu.memref_squeeze %21 : memref<1x16x128xf32, #tpu.memory_space<vmem>> -> memref<16x128xf32, #tpu.memory_space<vmem>>
      %23 = arith.index_cast %20 : i32 to index
      %c0 = arith.constant 0 : index
      %24 = vector.load %22[%23, %c0] : memref<16x128xf32, #tpu.memory_space<vmem>>, vector<16x128xf32>
      %c0_i32_18 = arith.constant 0 : i32
      %c0_i32_19 = arith.constant 0 : i32
      %25 = tpu.memref_slice %arg2[%c1_i32_7, %c0_i32_18, %c0_i32_19] : memref<6x16x128xf32, #tpu.memory_space<vmem>> -> memref<1x16x128xf32, #tpu.memory_space<vmem>>
      %26 = tpu.memref_squeeze %25 : memref<1x16x128xf32, #tpu.memory_space<vmem>> -> memref<16x128xf32, #tpu.memory_space<vmem>>
      %27 = arith.index_cast %20 : i32 to index
      %c0_20 = arith.constant 0 : index
      %28 = vector.load %26[%27, %c0_20] : memref<16x128xf32, #tpu.memory_space<vmem>>, vector<16x128xf32>
      %29 = arith.subf %24, %28 : vector<16x128xf32>
      %30 = math.absf %29 : vector<16x128xf32>
      %cst = arith.constant 0.000000e+00 : f32
      %31 = vector.broadcast %cst : f32 to vector<16x128xf32>
      %c0_i32_21 = arith.constant 0 : i32
      %c0_i32_22 = arith.constant 0 : i32
      %32 = tpu.memref_slice %arg2[%c2_i32_8, %c0_i32_21, %c0_i32_22] : memref<6x16x128xf32, #tpu.memory_space<vmem>> -> memref<1x16x128xf32, #tpu.memory_space<vmem>>
      %33 = tpu.memref_squeeze %32 : memref<1x16x128xf32, #tpu.memory_space<vmem>> -> memref<16x128xf32, #tpu.memory_space<vmem>>
      %34 = arith.index_cast %20 : i32 to index
      %c0_23 = arith.constant 0 : index
      %35 = vector.load %33[%34, %c0_23] : memref<16x128xf32, #tpu.memory_space<vmem>>, vector<16x128xf32>
      %36 = arith.subf %24, %35 : vector<16x128xf32>
      %37 = math.absf %36 : vector<16x128xf32>
      %38 = arith.subf %30, %37 : vector<16x128xf32>
      %39 = math.exp %38 : vector<16x128xf32>
      %40 = arith.addf %31, %39 : vector<16x128xf32>
      %c0_i32_24 = arith.constant 0 : i32
      %c0_i32_25 = arith.constant 0 : i32
      %41 = tpu.memref_slice %arg2[%c3_i32_9, %c0_i32_24, %c0_i32_25] : memref<6x16x128xf32, #tpu.memory_space<vmem>> -> memref<1x16x128xf32, #tpu.memory_space<vmem>>
      %42 = tpu.memref_squeeze %41 : memref<1x16x128xf32, #tpu.memory_space<vmem>> -> memref<16x128xf32, #tpu.memory_space<vmem>>
      %43 = arith.index_cast %20 : i32 to index
      %c0_26 = arith.constant 0 : index
      %44 = vector.load %42[%43, %c0_26] : memref<16x128xf32, #tpu.memory_space<vmem>>, vector<16x128xf32>
      %45 = arith.subf %24, %44 : vector<16x128xf32>
      %46 = math.absf %45 : vector<16x128xf32>
      %47 = arith.subf %30, %46 : vector<16x128xf32>
      %48 = math.exp %47 : vector<16x128xf32>
      %49 = arith.addf %40, %48 : vector<16x128xf32>
      %c0_i32_27 = arith.constant 0 : i32
      %c0_i32_28 = arith.constant 0 : i32
      %50 = tpu.memref_slice %arg2[%c4_i32_10, %c0_i32_27, %c0_i32_28] : memref<6x16x128xf32, #tpu.memory_space<vmem>> -> memref<1x16x128xf32, #tpu.memory_space<vmem>>
      %51 = tpu.memref_squeeze %50 : memref<1x16x128xf32, #tpu.memory_space<vmem>> -> memref<16x128xf32, #tpu.memory_space<vmem>>
      %52 = arith.index_cast %20 : i32 to index
      %c0_29 = arith.constant 0 : index
      %53 = vector.load %51[%52, %c0_29] : memref<16x128xf32, #tpu.memory_space<vmem>>, vector<16x128xf32>
      %54 = arith.subf %24, %53 : vector<16x128xf32>
      %55 = math.absf %54 : vector<16x128xf32>
      %56 = arith.subf %30, %55 : vector<16x128xf32>
      %57 = math.exp %56 : vector<16x128xf32>
      %58 = arith.addf %49, %57 : vector<16x128xf32>
      %c0_i32_30 = arith.constant 0 : i32
      %c0_i32_31 = arith.constant 0 : i32
      %59 = tpu.memref_slice %arg2[%c5_i32_11, %c0_i32_30, %c0_i32_31] : memref<6x16x128xf32, #tpu.memory_space<vmem>> -> memref<1x16x128xf32, #tpu.memory_space<vmem>>
      %60 = tpu.memref_squeeze %59 : memref<1x16x128xf32, #tpu.memory_space<vmem>> -> memref<16x128xf32, #tpu.memory_space<vmem>>
      %61 = arith.index_cast %20 : i32 to index
      %c0_32 = arith.constant 0 : index
      %62 = vector.load %60[%61, %c0_32] : memref<16x128xf32, #tpu.memory_space<vmem>>, vector<16x128xf32>
      %63 = arith.subf %24, %62 : vector<16x128xf32>
      %64 = math.absf %63 : vector<16x128xf32>
      %65 = arith.subf %30, %64 : vector<16x128xf32>
      %66 = math.exp %65 : vector<16x128xf32>
      %67 = arith.addf %58, %66 : vector<16x128xf32>
      %cst_33 = arith.constant 1.000000e+00 : f32
      %68 = vector.broadcast %cst_33 : f32 to vector<16x128xf32>
      %69 = arith.addf %67, %68 : vector<16x128xf32>
      %70 = math.log %69 : vector<16x128xf32>
      %c16_i32_34 = arith.constant 16 : i32
      %71 = arith.muli %1, %c16_i32_34 : i32
      %72 = arith.addi %71, %20 : i32
      %c128_i32_35 = arith.constant 128 : i32
      %73 = arith.muli %72, %c128_i32_35 : i32
      %74 = vector.broadcast %73 : i32 to vector<16x128xi32>
      %75 = arith.addi %18, %74 : vector<16x128xi32>
      %c16_i32_36 = arith.constant 16 : i32
      %76 = vector.broadcast %c16_i32_36 : i32 to vector<16x128xi32>
      %77 = arith.cmpi slt, %75, %76 : vector<16x128xi32>
      %cst_37 = arith.constant 0.000000e+00 : f32
      %78 = vector.broadcast %cst_37 : f32 to vector<16x128xf32>
      %79 = arith.select %77, %70, %78 : vector<16x128xi1>, vector<16x128xf32>
      %c0_38 = arith.constant 0 : index
      %c0_39 = arith.constant 0 : index
      %80 = vector.load %arg4[%c0_38, %c0_39] : memref<16x128xf32, #tpu.memory_space<vmem>>, vector<16x128xf32>
      %81 = arith.addf %80, %79 : vector<16x128xf32>
      %c0_40 = arith.constant 0 : index
      %c0_41 = arith.constant 0 : index
      %82 = vector.load %arg4[%c0_40, %c0_41] : memref<16x128xf32, #tpu.memory_space<vmem>>, vector<16x128xf32>
      tpu.vector_store %arg4[%c0_40, %c0_41], %81 {strides = array<i32>} : memref<16x128xf32, #tpu.memory_space<vmem>>, vector<16x128xf32>,
      %c1_i32_42 = arith.constant 1 : i32
    } else {
    }
    %c0_i32_13 = arith.constant 0 : i32
    %11 = arith.cmpi eq, %arg1, %c0_i32_13 : i32
    %12 = arith.extui %11 : i1 to i32
    %c0_i32_14 = arith.constant 0 : i32
    %13 = arith.cmpi ne, %12, %c0_i32_14 : i32
    scf.if %13 {
      %c0 = arith.constant 0 : index
      %c0_15 = arith.constant 0 : index
      %14 = vector.load %arg4[%c0, %c0_15] : memref<16x128xf32, #tpu.memory_space<vmem>>, vector<16x128xf32>
      %15 = vector.shape_cast %14 : vector<16x128xf32> to vector<1x16x128xf32>
      %cst = arith.constant dense<0.000000e+00> : vector<1xf32>
      %16 = vector.multi_reduction <add>, %15, %cst [1, 2] : vector<1x16x128xf32> to vector<1xf32>
      %17 = vector.shape_cast %16 : vector<1xf32> to vector<1x1x1xf32>
      %18 = vector.extract %17[0, 0, 0] : f32 from vector<1x1x1xf32>
      %19 = vector.broadcast %18 : f32 to vector<1x1xf32>
      %20 = vector.shape_cast %19 : vector<1x1xf32> to vector<1x1x1xf32>
      %c0_16 = arith.constant 0 : index
      %c0_17 = arith.constant 0 : index
      %c0_18 = arith.constant 0 : index
      %21 = vector.load %arg3[%c0_16, %c0_17, %c0_18] : memref<1x1x1xf32, #tpu.memory_space<vmem>>, vector<1x1x1xf32>
      tpu.vector_store %arg3[%c0_16, %c0_17, %c0_18], %20 {strides = array<i32>} : memref<1x1x1xf32, #tpu.memory_space<vmem>>, vector<1x1x1xf32>,
    } else {
    }
    return
  }
  func.func @transform_0(%arg0: i32, %arg1: i32) -> (i32, i32, i32) {
    %c1_i32 = arith.constant 1 : i32
    %0 = arith.muli %arg0, %c1_i32 : i32
    %1 = arith.addi %0, %arg1 : i32
    %c0_i32 = arith.constant 0 : i32
    %2 = arith.minsi %1, %c0_i32 : i32
    %c0_i32_0 = arith.constant 0 : i32
    %c0_i32_1 = arith.constant 0 : i32
    %c0_i32_2 = arith.constant 0 : i32
    return %c0_i32_0, %2, %c0_i32_1 : i32, i32, i32
  }
  func.func @transform_1(%arg0: i32, %arg1: i32) -> (i32, i32, i32) {
    %c0_i32 = arith.constant 0 : i32
    %c0_i32_0 = arith.constant 0 : i32
    %c0_i32_1 = arith.constant 0 : i32
    return %arg0, %c0_i32, %c0_i32_0 : i32, i32, i32
  }
}

</mosaic_0001>

<llo_original>
// kernel: tpu_custom_call.1
$region0: #{tpu_custom_call.1}
  #allocation0 [shape = 'u32[]', space=smem, size = 0x4, offset = 0x4, fixed_abs, tag = 'smem constant byte address 0x4 - core index']
  #allocation1 [shape = 'u32[144,128]{1,0:T(1,128)}', space=vmem, size = 0x12000, scoped, tag = 'internal scratch']
  #allocation2 [shape = 'f32[16,128]{1,0:T(8,128)}', space=vmem, size = 0x2000, scoped, tag = 'scratch operand']
  %s0 = inlined_call_operand.hbm [shape: f32[6,16,128], index: 0, kind: input, shape index: {}]
  %s1 = inlined_call_operand.hbm [shape: f32[1,1,1], index: 1, kind: output, shape index: {}]
  %s2 = sld [smem:[#allocation0]]
  $region34: #{tpu_custom_call.1} parent=0
    _
  %s4 = ssub.s32 1, %s2
  %s5 = scalar_select 0, %s4, %s2
  $region1: #{tpu_custom_call.1} parent=0
    #allocation3 [shape = 'u8[49152]{0}', space=vmem, size = 0xc000, scoped, tag = 'input window, operand 0, single buffered']
    #allocation4 [shape = 's32[1]{0}', space=sflag, size = 0x4, scoped, tag = 'scoped memory for tpu_custom_call.1']
    #allocation5 [shape = 's32[1]{0}', space=sflag, size = 0x4, scoped, tag = 'scoped memory for tpu_custom_call.1']
    #allocation6 [shape = 'u8[512]{0}', space=vmem, size = 0x400, scoped, tag = 'output window, operand 0, single buffered']
    %6 = vsyncpa [#allocation4], 0
    %7 = vsyncpa [#allocation5], 0
    // Predicated region
    $region2: #{tpu_custom_call.1} parent=1 // pred_check
      _
    $region3: #{tpu_custom_call.1} parent=1 // pred_check_branch
      %9 = sbr.rel (0) target = $region5
    $region4: #{tpu_custom_call.1} parent=1 // pred_region
      %s10 = sadd.s32 0, 0
      %p11 = scmp.lt.s32.totalorder %s10, 0
      %s12 = scalar_select %p11, %s10, 0
      %s13 = smul.u32 2, %s12
      %s15 = ssub.s32 1536, 1536
      %16 = vsyncadd [#allocation4], %s15
      %s17 = smul.addr %s13, 128
      %s18 = scalar_lea.hbm %s0, %s17
      %s19 = sshll.u32 [#allocation3], 4
      %s20 = int_to_ptr.vmem [resolvable:$true] %s19
      %25 = dma.hbm_to_vmem [thread:$0]  %s18, 1536, %s20, [#allocation4], 128, 128, 8
    $region5: #{tpu_custom_call.1} parent=1 // pred_fallthru
      _
    // Predicated region
    $region6: #{tpu_custom_call.1} parent=1 // pred_check
      _
    $region7: #{tpu_custom_call.1} parent=1 // pred_check_branch
      %27 = sbr.rel (0) target = $region9
    $region8: #{tpu_custom_call.1} parent=1 // pred_region
      %28 = dma.done [#allocation4], 1536
    $region9: #{tpu_custom_call.1} parent=1 // pred_fallthru
      _
    %s29 = sadd.s32 0, 0
    %p30 = scmp.lt.s32.totalorder %s29, 0
    %s31 = scalar_select %p30, %s29, 0
    %s32 = smul.u32 2, %s31
    %s33 = sadd.s32 0, 0
    %p34 = scmp.eq.s32.totalorder 0, 0
    // Predicated region
    $region10: #{tpu_custom_call.1} parent=1 // pred_check
      %p35 = pneg %p34
    $region11: #{tpu_custom_call.1} parent=1 // pred_check_branch
      %37 = sbr.rel (%p35) target = $region13
    $region12: #{tpu_custom_call.1} parent=1 // pred_region
      %38 = vst [vmem:[#allocation2] sm:$0xff] 0.0
      %39 = vst [vmem:[#allocation2 + $0x8] sm:$0xff] 0.0
    $region13: #{tpu_custom_call.1} parent=1 // pred_fallthru
      _
    %p40 = scmp.lt.s32.totalorder %s33, 0
    // Predicated region
    $region14: #{tpu_custom_call.1} parent=1 // pred_check
      %p41 = pneg %p40
    $region15: #{tpu_custom_call.1} parent=1 // pred_check_branch
      %43 = sbr.rel (%p41) target = $region17
    $region16: #{tpu_custom_call.1} parent=1 // pred_region
      %v44 = vld [vmem:[#allocation3] sm:$0xff]
      %v45 = vld [vmem:[#allocation3 + $0x8] sm:$0xff]
      %s46 = scalar_lea.vmem [#allocation3], 16
      %v47 = vld [vmem:[%s46] sm:$0xff]
      %v48 = vld [vmem:[%s46 + $0x8] sm:$0xff]
      %v49 = vsub.f32 %v44, %v47
      %v50 = vsub.f32 %v45, %v48
      %v51 = vand.u32 2147483647, %v49
      %v52 = vand.u32 2147483647, %v50
      %s53 = scalar_lea.vmem [#allocation3], 32
      %v54 = vld [vmem:[%s53] sm:$0xff]
      %v55 = vld [vmem:[%s53 + $0x8] sm:$0xff]
      %v56 = vsub.f32 %v44, %v54
      %v57 = vsub.f32 %v45, %v55
      %v58 = vand.u32 2147483647, %v56
      %v59 = vand.u32 2147483647, %v57
      %v60 = vsub.f32 %v51, %v58
      %v61 = vsub.f32 %v52, %v59
      %v62 = vmul.f32 %v60, 1.442695
      %v63 = vpow.pop %v62
      %v64 = vmul.f32 %v61, 1.442695
      %v65 = vpow.pop %v64
      %v66 = vadd.f32 %v63, 0.0
      %v67 = vadd.f32 %v65, 0.0
      %s68 = scalar_lea.vmem [#allocation3], 48
      %v69 = vld [vmem:[%s68] sm:$0xff]
      %v70 = vld [vmem:[%s68 + $0x8] sm:$0xff]
      %v71 = vsub.f32 %v44, %v69
      %v72 = vsub.f32 %v45, %v70
      %v73 = vand.u32 2147483647, %v71
      %v74 = vand.u32 2147483647, %v72
      %v75 = vsub.f32 %v51, %v73
      %v76 = vsub.f32 %v52, %v74
      %v77 = vmul.f32 %v75, 1.442695
      %v78 = vpow.pop %v77
      %v79 = vmul.f32 %v76, 1.442695
      %v80 = vpow.pop %v79
      %v81 = vadd.f32 %v66, %v78
      %v82 = vadd.f32 %v67, %v80
      %s83 = scalar_lea.vmem [#allocation3], 64
      %v84 = vld [vmem:[%s83] sm:$0xff]
      %v85 = vld [vmem:[%s83 + $0x8] sm:$0xff]
      %v86 = vsub.f32 %v44, %v84
      %v87 = vsub.f32 %v45, %v85
      %v88 = vand.u32 2147483647, %v86
      %v89 = vand.u32 2147483647, %v87
      %v90 = vsub.f32 %v51, %v88
      %v91 = vsub.f32 %v52, %v89
      %v92 = vmul.f32 %v90, 1.442695
      %v93 = vpow.pop %v92
      %v94 = vmul.f32 %v91, 1.442695
      %v95 = vpow.pop %v94
      %v96 = vadd.f32 %v81, %v93
      %v97 = vadd.f32 %v82, %v95
      %s98 = scalar_lea.vmem [#allocation3], 80
      %v99 = vld [vmem:[%s98] sm:$0xff]
      %v100 = vld [vmem:[%s98 + $0x8] sm:$0xff]
      %v101 = vsub.f32 %v44, %v99
      %v102 = vsub.f32 %v45, %v100
      %v103 = vand.u32 2147483647, %v101
      %v104 = vand.u32 2147483647, %v102
      %v105 = vsub.f32 %v51, %v103
      %v106 = vsub.f32 %v52, %v104
      %v107 = vmul.f32 %v105, 1.442695
      %v108 = vpow.pop %v107
      %v109 = vmul.f32 %v106, 1.442695
      %v110 = vpow.pop %v109
      %v111 = vadd.f32 %v96, %v108
      %v112 = vadd.f32 %v97, %v110
      %v113 = vadd.f32 %v111, 1.0
      %v114 = vadd.f32 %v112, 1.0
      %v115 = vlog2.pop %v113
      %v116 = vmul.f32 %v115, 0.6931472
      %v117 = vlog2.pop %v114
      %v118 = vmul.f32 %v117, 0.6931472
      %v119 = vld [vmem:[#allocation2] sm:$0xff]
      %v120 = vld [vmem:[#allocation2 + $0x8] sm:$0xff]
      %v121 = vadd.f32 %v119, %v116
      %v122 = vadd.f32 %v120, %v118
      %123 = vst [vmem:[#allocation2] sm:$0xff] %v121
      %124 = vst [vmem:[#allocation2 + $0x8] sm:$0xff] %v122
    $region17: #{tpu_custom_call.1} parent=1 // pred_fallthru
      _
    %p125 = scmp.ge.s32.totalorder %s33, 0
    // Predicated region
    $region18: #{tpu_custom_call.1} parent=1 // pred_check
      %p126 = pneg %p125
    $region19: #{tpu_custom_call.1} parent=1 // pred_check_branch
      %128 = sbr.rel (%p126) target = $region21
    $region20: #{tpu_custom_call.1} parent=1 // pred_region
      %v129 = vlaneseq
      %v130 = vshrl.u32 %v129, 7
      %v131 = vadd.s32 %v130, 8
      %v132 = vlaneseq
      %v133 = vand.u32 %v132, 127
      %v134 = vmul.u32 %v130, 128
      %v135 = vmul.u32 %v131, 128
      %v136 = vadd.s32 %v134, %v133
      %v137 = vadd.s32 %v135, %v133
      %v138 = vld [vmem:[#allocation3] sm:$0xff]
      %v139 = vld [vmem:[#allocation3 + $0x8] sm:$0xff]
      %s140 = scalar_lea.vmem [#allocation3], 16
      %v141 = vld [vmem:[%s140] sm:$0xff]
      %v142 = vld [vmem:[%s140 + $0x8] sm:$0xff]
      %v143 = vsub.f32 %v138, %v141
      %v144 = vsub.f32 %v139, %v142
      %v145 = vand.u32 2147483647, %v143
      %v146 = vand.u32 2147483647, %v144
      %s147 = scalar_lea.vmem [#allocation3], 32
      %v148 = vld [vmem:[%s147] sm:$0xff]
      %v149 = vld [vmem:[%s147 + $0x8] sm:$0xff]
      %v150 = vsub.f32 %v138, %v148
      %v151 = vsub.f32 %v139, %v149
      %v152 = vand.u32 2147483647, %v150
      %v153 = vand.u32 2147483647, %v151
      %v154 = vsub.f32 %v145, %v152
      %v155 = vsub.f32 %v146, %v153
      %v156 = vmul.f32 %v154, 1.442695
      %v157 = vpow.pop %v156
      %v158 = vmul.f32 %v155, 1.442695
      %v159 = vpow.pop %v158
      %v160 = vadd.f32 %v157, 0.0
      %v161 = vadd.f32 %v159, 0.0
      %s162 = scalar_lea.vmem [#allocation3], 48
      %v163 = vld [vmem:[%s162] sm:$0xff]
      %v164 = vld [vmem:[%s162 + $0x8] sm:$0xff]
      %v165 = vsub.f32 %v138, %v163
      %v166 = vsub.f32 %v139, %v164
      %v167 = vand.u32 2147483647, %v165
      %v168 = vand.u32 2147483647, %v166
      %v169 = vsub.f32 %v145, %v167
      %v170 = vsub.f32 %v146, %v168
      %v171 = vmul.f32 %v169, 1.442695
      %v172 = vpow.pop %v171
      %v173 = vmul.f32 %v170, 1.442695
      %v174 = vpow.pop %v173
      %v175 = vadd.f32 %v160, %v172
      %v176 = vadd.f32 %v161, %v174
      %s177 = scalar_lea.vmem [#allocation3], 64
      %v178 = vld [vmem:[%s177] sm:$0xff]
      %v179 = vld [vmem:[%s177 + $0x8] sm:$0xff]
      %v180 = vsub.f32 %v138, %v178
      %v181 = vsub.f32 %v139, %v179
      %v182 = vand.u32 2147483647, %v180
      %v183 = vand.u32 2147483647, %v181
      %v184 = vsub.f32 %v145, %v182
      %v185 = vsub.f32 %v146, %v183
      %v186 = vmul.f32 %v184, 1.442695
      %v187 = vpow.pop %v186
      %v188 = vmul.f32 %v185, 1.442695
      %v189 = vpow.pop %v188
      %v190 = vadd.f32 %v175, %v187
      %v191 = vadd.f32 %v176, %v189
      %s192 = scalar_lea.vmem [#allocation3], 80
      %v193 = vld [vmem:[%s192] sm:$0xff]
      %v194 = vld [vmem:[%s192 + $0x8] sm:$0xff]
      %v195 = vsub.f32 %v138, %v193
      %v196 = vsub.f32 %v139, %v194
      %v197 = vand.u32 2147483647, %v195
      %v198 = vand.u32 2147483647, %v196
      %v199 = vsub.f32 %v145, %v197
      %v200 = vsub.f32 %v146, %v198
      %v201 = vmul.f32 %v199, 1.442695
      %v202 = vpow.pop %v201
      %v203 = vmul.f32 %v200, 1.442695
      %v204 = vpow.pop %v203
      %v205 = vadd.f32 %v190, %v202
      %v206 = vadd.f32 %v191, %v204
      %v207 = vadd.f32 %v205, 1.0
      %v208 = vadd.f32 %v206, 1.0
      %v209 = vlog2.pop %v207
      %v210 = vmul.f32 %v209, 0.6931472
      %v211 = vlog2.pop %v208
      %v212 = vmul.f32 %v211, 0.6931472
      %s213 = smul.u32 %s33, 16
      %s214 = sadd.s32 %s213, 0
      %s215 = smul.u32 %s214, 128
      %v216 = vstv %s215
      %v217 = vadd.s32 %v136, %v216
      %v218 = vadd.s32 %v137, %v216
      %vm219 = vcmp.lt.s32.totalorder %v217, 16
      %vm220 = vcmp.lt.s32.totalorder %v218, 16
      %v221 = vsel %vm219, %v210, 0.0
      %v222 = vsel %vm220, %v212, 0.0
      %v223 = vld [vmem:[#allocation2] sm:$0xff]
      %v224 = vld [vmem:[#allocation2 + $0x8] sm:$0xff]
      %v225 = vadd.f32 %v223, %v221
      %v226 = vadd.f32 %v224, %v222
      %227 = vst [vmem:[#allocation2] sm:$0xff] %v225
      %228 = vst [vmem:[#allocation2 + $0x8] sm:$0xff] %v226
    $region21: #{tpu_custom_call.1} parent=1 // pred_fallthru
      _
    // Predicated region
    $region22: #{tpu_custom_call.1} parent=1 // pred_check
      %p229 = pneg %p34
    $region23: #{tpu_custom_call.1} parent=1 // pred_check_branch
      %231 = sbr.rel (%p229) target = $region25
    $region24: #{tpu_custom_call.1} parent=1 // pred_region
      %v232 = vld [vmem:[#allocation2] sm:$0xff]
      %v233 = vld [vmem:[#allocation2 + $0x8] sm:$0xff]
      %v234 = vadd.f32 %v232, %v233
      %235 = vadd.xlane.f32.xlu0 %v234
      %v236 = vpop.xlane.xlu0 %235
      %v237 = vrot.slane %v236, 4
      %v238 = vadd.f32 %v236, %v237
      %v239 = vrot.slane %v238, 2
      %v240 = vadd.f32 %v238, %v239
      %v241 = vrot.slane %v240, 1
      %v242 = vadd.f32 %v240, %v241
      %s243 = vtos %v242
      %v244 = vstv %s243
      %vm245 = vcmask 0
      %246 = vst.msk [vmem:[#allocation6] sm:$0x1] %vm245, %v244
    $region25: #{tpu_custom_call.1} parent=1 // pred_fallthru
      _
    // Predicated region
    $region26: #{tpu_custom_call.1} parent=1 // pred_check
      _
    $region27: #{tpu_custom_call.1} parent=1 // pred_check_branch
      %248 = sbr.rel (0) target = $region29
    $region28: #{tpu_custom_call.1} parent=1 // pred_region
      %s250 = ssub.s32 16, 16
      %251 = vsyncadd [#allocation5], %s250
      %s253 = sshll.u32 [#allocation6], 4
      %s254 = int_to_ptr.vmem [resolvable:$true] %s253
      %256 = dma.vmem_to_hbm [thread:$0]  %s254, 16, %s1, [#allocation5]
    $region29: #{tpu_custom_call.1} parent=1 // pred_fallthru
      _
    // Predicated region
    $region30: #{tpu_custom_call.1} parent=1 // pred_check
      _
    $region31: #{tpu_custom_call.1} parent=1 // pred_check_branch
      %258 = sbr.rel (0) target = $region33
    $region32: #{tpu_custom_call.1} parent=1 // pred_region
      %259 = dma.done [#allocation5], 16
    $region33: #{tpu_custom_call.1} parent=1 // pred_fallthru
      _
    %260 = vsyncpa [#allocation4], 1
    %261 = vsyncpa [#allocation5], 1

</llo_original>
